<compile_context>
chip_gen: v7x
topology: tpu7x:2x2x1
jax: 0.10.0
libtpu: 0.0.40
codegen_flags: <defaults>
</compile_context>

<pallas_src>
import math
import functools

import jax
import jax.numpy as jnp
from jax.experimental import pallas as pl
from jax.experimental.pallas import tpu as pltpu


_MM_DTYPE = jnp.bfloat16                 # MXU operand dtype (f32 accumulation)
_VMEM_LIMIT = 32 * 1024 * 1024           # explicit scoped-VMEM budget (v5e/v6e/v7x safe)
_LN_EPS = 1e-5


def _pick_tile(dim, pref, align):
    """Largest tile <= pref that is a multiple of `align` and divides `dim`,
    falling back to the whole dim (always a legal block)."""
    if dim <= pref:
        return dim
    t = max(align, (pref // align) * align)
    while t >= align:
        if dim % t == 0:
            return t
        t -= align
    return dim


# --------------------------- tiled linear (QKV) -----------------------------

def _linear_kernel(x_ref, w_ref, b_ref, o_ref, acc_ref, *, activation):
    @pl.when(pl.program_id(2) == 0)
    def _():
        acc_ref[...] = jnp.zeros_like(acc_ref)

    acc_ref[...] += jnp.dot(x_ref[...].astype(_MM_DTYPE),
                            w_ref[...].astype(_MM_DTYPE),
                            preferred_element_type=jnp.float32)

    @pl.when(pl.program_id(2) == pl.num_programs(2) - 1)
    def _():
        y = acc_ref[...] + b_ref[...]
        if activation == "relu":
            y = jnp.maximum(y, 0.0)
        o_ref[...] = y.astype(o_ref.dtype)


def linear(x2d, w, b, activation="none"):
    """y = act(x2d @ w + b).  x2d:(M,K) f32, w:(K,N) bf16, b:(1,N) f32."""
    M, K = x2d.shape
    K2, N = w.shape
    assert K == K2
    tm = _pick_tile(M, 256, 8)
    tn = _pick_tile(N, 256, 128)
    tk = _pick_tile(K, 512, 128)
    grid = (M // tm, N // tn, K // tk)
    bytes_accessed = (x2d.size * x2d.dtype.itemsize + w.size * w.dtype.itemsize
                      + b.size * b.dtype.itemsize + M * N * 4)
    return pl.pallas_call(
        functools.partial(_linear_kernel, activation=activation),
        grid=grid,
        in_specs=[
            pl.BlockSpec((tm, tk), lambda i, j, k: (i, k)),
            pl.BlockSpec((tk, tn), lambda i, j, k: (k, j)),
            pl.BlockSpec((1, tn), lambda i, j, k: (0, j)),
        ],
        out_specs=pl.BlockSpec((tm, tn), lambda i, j, k: (i, j)),
        out_shape=jax.ShapeDtypeStruct((M, N), jnp.float32),
        scratch_shapes=[pltpu.VMEM((tm, tn), jnp.float32)],
        compiler_params=pltpu.CompilerParams(
            dimension_semantics=("parallel", "parallel", "arbitrary"),
            vmem_limit_bytes=_VMEM_LIMIT),
        cost_estimate=pl.CostEstimate(flops=2 * M * N * K, transcendentals=0,
                                      bytes_accessed=bytes_accessed),
    )(x2d, w, b)


# ------------------------- flash multi-head attention -----------------------

def _flash_attn_kernel(q_ref, k_ref, v_ref, o_ref, m_sc, l_sc, acc_sc,
                       *, nheads, scale):
    kv_i = pl.program_id(2)
    d = q_ref.shape[2]
    dh = d // nheads

    @pl.when(kv_i == 0)
    def _():
        m_sc[...] = jnp.full_like(m_sc, -1e30)
        l_sc[...] = jnp.zeros_like(l_sc)
        acc_sc[...] = jnp.zeros_like(acc_sc)

    q = q_ref[0].astype(_MM_DTYPE)            # (tq, D)
    k = k_ref[0].astype(_MM_DTYPE)            # (tk, D)
    v = v_ref[0].astype(_MM_DTYPE)            # (tk, D)

    for h in range(nheads):                   # static unroll over heads
        sl = slice(h * dh, (h + 1) * dh)
        # q k^T contracted over the head dim directly (no materialized k.T)
        s = jax.lax.dot_general(
            q[:, sl], k[:, sl], (((1,), (1,)), ((), ())),
            preferred_element_type=jnp.float32) * scale           # (tq, tk)
        m_prev = m_sc[h]                                          # (tq, 1)
        m_new = jnp.maximum(m_prev, jnp.max(s, axis=-1, keepdims=True))
        alpha = jnp.exp(m_prev - m_new)
        p = jnp.exp(s - m_new)                                    # (tq, tk)
        l_sc[h] = alpha * l_sc[h] + jnp.sum(p, axis=-1, keepdims=True)
        pv = jax.lax.dot_general(
            p.astype(_MM_DTYPE), v[:, sl], (((1,), (0,)), ((), ())),
            preferred_element_type=jnp.float32)                   # (tq, dh)
        acc_sc[h] = alpha * acc_sc[h] + pv
        m_sc[h] = m_new

    @pl.when(kv_i == pl.num_programs(2) - 1)
    def _():
        outs = [acc_sc[h] * pl.reciprocal(l_sc[h], approx=True)
                for h in range(nheads)]
        # single lane-dense (tq, D) store
        o_ref[0] = jnp.concatenate(outs, axis=-1).astype(o_ref.dtype)


def flash_attention(qkv, nheads, scale):
    """qkv: (B, S, 3*D) fused projections -> (B, S, D) attention output."""
    B, S, D3 = qkv.shape
    D = D3 // 3
    dh = D // nheads
    tq = _pick_tile(S, 256, 8)
    tk = _pick_tile(S, 512, 128)
    grid = (B, S // tq, S // tk)

    if D % 128 == 0:
        # slice q/k/v out of the fused qkv array via the BlockSpec index_map
        # (block index 0/1/2 on the last axis) -- no HBM slicing/transposes.
        arrs = (qkv, qkv, qkv)
        q_last, k_last, v_last = 0, 1, 2
    else:
        # fallback when D is not lane-aligned: slice in the wrapper so the
        # block's last dim equals the full array dim.
        arrs = (jax.lax.slice_in_dim(qkv, 0, D, axis=2),
                jax.lax.slice_in_dim(qkv, D, 2 * D, axis=2),
                jax.lax.slice_in_dim(qkv, 2 * D, 3 * D, axis=2))
        q_last = k_last = v_last = 0

    in_specs = [
        pl.BlockSpec((1, tq, D), lambda b, qi, ki, _l=q_last: (b, qi, _l)),
        pl.BlockSpec((1, tk, D), lambda b, qi, ki, _l=k_last: (b, ki, _l)),
        pl.BlockSpec((1, tk, D), lambda b, qi, ki, _l=v_last: (b, ki, _l)),
    ]
    out_spec = pl.BlockSpec((1, tq, D), lambda b, qi, ki: (b, qi, 0))

    return pl.pallas_call(
        functools.partial(_flash_attn_kernel, nheads=nheads, scale=scale),
        grid=grid,
        in_specs=in_specs,
        out_specs=out_spec,
        out_shape=jax.ShapeDtypeStruct((B, S, D), jnp.float32),
        scratch_shapes=[
            pltpu.VMEM((nheads, tq, 1), jnp.float32),    # running max
            pltpu.VMEM((nheads, tq, 1), jnp.float32),    # running sum
            pltpu.VMEM((nheads, tq, dh), jnp.float32),   # output accumulator
        ],
        compiler_params=pltpu.CompilerParams(
            dimension_semantics=("parallel", "parallel", "arbitrary"),
            vmem_limit_bytes=_VMEM_LIMIT),
        cost_estimate=pl.CostEstimate(
            flops=4 * B * S * S * D,
            transcendentals=nheads * B * S * S,
            bytes_accessed=4 * (qkv.size + B * S * D)),
    )(*arrs)


# ---------------- fused output-projection + residual + LayerNorm ------------

def _outproj_ln_kernel(a_ref, w_ref, b_ref, x_ref, g_ref, bt_ref, o_ref, acc_ref):
    @pl.when(pl.program_id(1) == 0)
    def _():
        acc_ref[...] = jnp.zeros_like(acc_ref)

    acc_ref[...] += jnp.dot(a_ref[...].astype(_MM_DTYPE),
                            w_ref[...].astype(_MM_DTYPE),
                            preferred_element_type=jnp.float32)

    @pl.when(pl.program_id(1) == pl.num_programs(1) - 1)
    def _():
        h = x_ref[...] + acc_ref[...] + b_ref[...]
        mu = jnp.mean(h, axis=-1, keepdims=True)
        var = jnp.mean(jnp.square(h - mu), axis=-1, keepdims=True)
        o_ref[...] = ((h - mu) * jax.lax.rsqrt(var + _LN_EPS) * g_ref[...]
                      + bt_ref[...]).astype(o_ref.dtype)


def outproj_add_ln(attn2d, w, b, resid2d, gamma, beta):
    """LayerNorm(resid + attn @ w + b)  — out-proj, residual and LN fused."""
    M, K = attn2d.shape
    _, D = w.shape
    tm = _pick_tile(M, 256, 8)
    tk = _pick_tile(K, 512, 128)
    grid = (M // tm, K // tk)
    return pl.pallas_call(
        _outproj_ln_kernel,
        grid=grid,
        in_specs=[
            pl.BlockSpec((tm, tk), lambda i, k: (i, k)),
            pl.BlockSpec((tk, D), lambda i, k: (k, 0)),
            pl.BlockSpec((1, D), lambda i, k: (0, 0)),
            pl.BlockSpec((tm, D), lambda i, k: (i, 0)),
            pl.BlockSpec((1, D), lambda i, k: (0, 0)),
            pl.BlockSpec((1, D), lambda i, k: (0, 0)),
        ],
        out_specs=pl.BlockSpec((tm, D), lambda i, k: (i, 0)),
        out_shape=jax.ShapeDtypeStruct((M, D), jnp.float32),
        scratch_shapes=[pltpu.VMEM((tm, D), jnp.float32)],
        compiler_params=pltpu.CompilerParams(
            dimension_semantics=("parallel", "arbitrary"),
            vmem_limit_bytes=_VMEM_LIMIT),
        cost_estimate=pl.CostEstimate(
            flops=2 * M * K * D, transcendentals=0,
            bytes_accessed=4 * (attn2d.size + resid2d.size + M * D)
                           + w.size * w.dtype.itemsize),
    )(attn2d, w, b, resid2d, gamma, beta)


# ----------------- fused FFN (relu MLP) + residual + LayerNorm ---------------

def _ffn_ln_kernel(n_ref, wa_ref, ba_ref, wb_ref, bb_ref, g_ref, bt_ref,
                   o_ref, acc_ref):
    @pl.when(pl.program_id(1) == 0)
    def _():
        acc_ref[...] = jnp.zeros_like(acc_ref)

    # hidden tile relu(n @ wA[:, blk] + bA[blk]) stays in VMEM, immediately
    # multiplied by wB[blk, :] and accumulated.
    hid = jnp.dot(n_ref[...].astype(_MM_DTYPE), wa_ref[...].astype(_MM_DTYPE),
                  preferred_element_type=jnp.float32) + ba_ref[...]
    hid = jnp.maximum(hid, 0.0)
    acc_ref[...] += jnp.dot(hid.astype(_MM_DTYPE), wb_ref[...].astype(_MM_DTYPE),
                            preferred_element_type=jnp.float32)

    @pl.when(pl.program_id(1) == pl.num_programs(1) - 1)
    def _():
        h = n_ref[...] + acc_ref[...] + bb_ref[...]
        mu = jnp.mean(h, axis=-1, keepdims=True)
        var = jnp.mean(jnp.square(h - mu), axis=-1, keepdims=True)
        o_ref[...] = ((h - mu) * jax.lax.rsqrt(var + _LN_EPS) * g_ref[...]
                      + bt_ref[...]).astype(o_ref.dtype)


def ffn_add_ln(n2d, wA, bA, wB, bB, gamma, beta):
    """LayerNorm(n + relu(n @ wA + bA) @ wB + bB), hidden tiled over 4D axis."""
    M, D = n2d.shape
    _, H4 = wA.shape
    tm = _pick_tile(M, 256, 8)
    th = _pick_tile(H4, 512, 128)
    grid = (M // tm, H4 // th)
    return pl.pallas_call(
        _ffn_ln_kernel,
        grid=grid,
        in_specs=[
            pl.BlockSpec((tm, D), lambda i, h: (i, 0)),
            pl.BlockSpec((D, th), lambda i, h: (0, h)),
            pl.BlockSpec((1, th), lambda i, h: (0, h)),
            pl.BlockSpec((th, D), lambda i, h: (h, 0)),
            pl.BlockSpec((1, D), lambda i, h: (0, 0)),
            pl.BlockSpec((1, D), lambda i, h: (0, 0)),
            pl.BlockSpec((1, D), lambda i, h: (0, 0)),
        ],
        out_specs=pl.BlockSpec((tm, D), lambda i, h: (i, 0)),
        out_shape=jax.ShapeDtypeStruct((M, D), jnp.float32),
        scratch_shapes=[pltpu.VMEM((tm, D), jnp.float32)],
        compiler_params=pltpu.CompilerParams(
            dimension_semantics=("parallel", "arbitrary"),
            vmem_limit_bytes=_VMEM_LIMIT),
        cost_estimate=pl.CostEstimate(
            flops=4 * M * D * H4, transcendentals=0,
            bytes_accessed=4 * (2 * n2d.size + M * D)
                           + wA.size * wA.dtype.itemsize
                           + wB.size * wB.dtype.itemsize),
    )(n2d, wA, bA, wB, bB, gamma, beta)


# ------------------------------ model glue ----------------------------------

def encoder_block(x, p, numheads):
    B, S, D = x.shape
    M = B * S
    x2 = x.reshape(M, D)
    # fused Q|K|V projection: one (M, 3D) matmul instead of three (M, D) ones
    qkv = linear(x2, p["wqkv"], p["bqkv"]).reshape(B, S, 3 * D)
    attn = flash_attention(qkv, numheads, 1.0 / math.sqrt(D // numheads))
    # n = LayerNorm(x + out_proj(attn))        (out-proj + residual + LN fused)
    n2 = outproj_add_ln(attn.reshape(M, D), p["wo"], p["bo"], x2,
                        p["ln1_g"], p["ln1_b"])
    # h = LayerNorm(n + FFN(n))                (FFN + residual + LN fused)
    out2 = ffn_add_ln(n2, p["wA"], p["bA"], p["wB"], p["bB"],
                      p["ln2_g"], p["ln2_b"])
    return out2.reshape(B, S, D)


def transformer_encoder(x, params):
    B, S, D = x.shape
    # learned absolute position embedding (q.WordEmb lookup of 0..S-1)
    h = x + params["posemb"][:S][None, :, :]
    for p in params["layers"]:
        h = encoder_block(h, p, params["numheads"])
    return h


def init_params(key, dim, numheads, numlayers, maxlen):
    dh = dim // numheads
    keys = jax.random.split(key, 1 + numlayers)
    params = {"numheads": numheads}
    params["posemb"] = jax.random.normal(keys[0], (maxlen, dim), jnp.float32) * 0.1
    std_qk = math.sqrt(2.0 / (dim + dh))         # q/k/v proj init std
    std_ff = math.sqrt(2.0 / (dim + 4 * dim))    # FFN init std
    std_xav = math.sqrt(2.0 / (dim + dim))       # xavier_normal for vw_proj
    layers = []
    for li in range(numlayers):
        ks = jax.random.split(keys[1 + li], 6)
        wq = jax.random.normal(ks[0], (dim, dim), jnp.float32) * std_qk
        wk = jax.random.normal(ks[1], (dim, dim), jnp.float32) * std_qk
        wv = jax.random.normal(ks[2], (dim, dim), jnp.float32) * std_qk
        p = dict(
            # fused Q|K|V weight (D, 3D); MXU weights stored in bf16
            wqkv=jnp.concatenate([wq, wk, wv], axis=1).astype(_MM_DTYPE),
            bqkv=jnp.zeros((1, 3 * dim), jnp.float32),
            wo=(jax.random.normal(ks[3], (dim, dim), jnp.float32)
                * std_xav).astype(_MM_DTYPE),
            bo=jnp.zeros((1, dim), jnp.float32),
            ln1_g=jnp.ones((1, dim), jnp.float32),
            ln1_b=jnp.zeros((1, dim), jnp.float32),
            wA=(jax.random.normal(ks[4], (dim, 4 * dim), jnp.float32)
                * std_ff).astype(_MM_DTYPE),
            bA=jnp.zeros((1, 4 * dim), jnp.float32),
            wB=(jax.random.normal(ks[5], (4 * dim, dim), jnp.float32)
                * std_ff).astype(_MM_DTYPE),
            bB=jnp.zeros((1, dim), jnp.float32),
            ln2_g=jnp.ones((1, dim), jnp.float32),
            ln2_b=jnp.zeros((1, dim), jnp.float32),
        )
        layers.append(p)
    params["layers"] = layers
    return params


if __name__ == "__main__":
    # small, module-consistent shapes (dim a multiple of 128 for lane-dense blocks)
    B, S, DIM = 2, 8, 128
    NUMHEADS, NUMLAYERS, MAXLEN = 4, 2, 16   # seqlen < maxlen as the module asserts

    key = jax.random.PRNGKey(0)
    kx, kp = jax.random.split(key)
    x = jax.random.normal(kx, (B, S, DIM), jnp.float32)
    params = init_params(kp, DIM, NUMHEADS, NUMLAYERS, MAXLEN)

    out = transformer_encoder(x, params)
    out = jax.block_until_ready(out)
    assert out.shape == (B, S, DIM), out.shape
    assert bool(jnp.all(jnp.isfinite(out)))
    print("KERNEL_OK")
</pallas_src>

<mosaic_0001>
module attributes {stable_mosaic.version = 11 : i64} {
  func.func @_linear_kernel(%arg0: i32, %arg1: i32, %arg2: i32, %arg3: memref<16x128xf32, #tpu.memory_space<vmem>>, %arg4: memref<128x128xbf16, #tpu.memory_space<vmem>>, %arg5: memref<1x128xf32, #tpu.memory_space<vmem>>, %arg6: memref<16x128xf32, #tpu.memory_space<vmem>>, %arg7: memref<16x128xf32, #tpu.memory_space<vmem>>) attributes {dimension_semantics = [#tpu.dimension_semantics<parallel>, #tpu.dimension_semantics<parallel>, #tpu.dimension_semantics<arbitrary>], iteration_bounds = array<i64: 1, 3, 1>, scalar_prefetch = 0 : i64, scratch_operands = 1 : i64, tpu.core_type = #tpu.core_type<tc>, window_params = [{transform_indices = @transform_0, window_bounds = array<i64: 16, 128>}, {transform_indices = @transform_1, window_bounds = array<i64: 128, 128>}, {transform_indices = @transform_2, window_bounds = array<i64: 1, 128>}, {transform_indices = @transform_3, window_bounds = array<i64: 16, 128>}]} {
    %c0_i32 = arith.constant 0 : i32
    %0 = arith.cmpi eq, %arg2, %c0_i32 : i32
    %1 = arith.extui %0 : i1 to i32
    %c0_i32_0 = arith.constant 0 : i32
    %2 = arith.cmpi ne, %1, %c0_i32_0 : i32
    scf.if %2 {
      %cst_10 = arith.constant 0.000000e+00 : f32
      %13 = vector.broadcast %cst_10 : f32 to vector<16x128xf32>
      %c0_11 = arith.constant 0 : index
      %c0_12 = arith.constant 0 : index
      %14 = vector.load %arg7[%c0_11, %c0_12] : memref<16x128xf32, #tpu.memory_space<vmem>>, vector<16x128xf32>
      tpu.vector_store %arg7[%c0_11, %c0_12], %13 {strides = array<i32>} : memref<16x128xf32, #tpu.memory_space<vmem>>, vector<16x128xf32>,
    } else {
    }
    %c0 = arith.constant 0 : index
    %c0_1 = arith.constant 0 : index
    %3 = vector.load %arg7[%c0, %c0_1] : memref<16x128xf32, #tpu.memory_space<vmem>>, vector<16x128xf32>
    %c0_2 = arith.constant 0 : index
    %c0_3 = arith.constant 0 : index
    %4 = vector.load %arg3[%c0_2, %c0_3] : memref<16x128xf32, #tpu.memory_space<vmem>>, vector<16x128xf32>
    %5 = arith.truncf %4 : vector<16x128xf32> to vector<16x128xbf16>
    %c0_4 = arith.constant 0 : index
    %c0_5 = arith.constant 0 : index
    %6 = vector.load %arg4[%c0_4, %c0_5] : memref<128x128xbf16, #tpu.memory_space<vmem>>, vector<128x128xbf16>
    %cst = arith.constant dense<0.000000e+00> : vector<16x128xf32>
    %7 = tpu.matmul %5, %6, %cst {dimension_numbers = #tpu.dot_dimension_numbers<[1], [0], [0], [1], [0, 0, 1, 1], [], []>} : vector<16x128xbf16>, vector<128x128xbf16>, vector<16x128xf32> -> vector<16x128xf32>
    %8 = arith.addf %3, %7 : vector<16x128xf32>
    %c0_6 = arith.constant 0 : index
    %c0_7 = arith.constant 0 : index
    %9 = vector.load %arg7[%c0_6, %c0_7] : memref<16x128xf32, #tpu.memory_space<vmem>>, vector<16x128xf32>
    tpu.vector_store %arg7[%c0_6, %c0_7], %8 {strides = array<i32>} : memref<16x128xf32, #tpu.memory_space<vmem>>, vector<16x128xf32>,
    %c0_i32_8 = arith.constant 0 : i32
    %10 = arith.cmpi eq, %arg2, %c0_i32_8 : i32
    %11 = arith.extui %10 : i1 to i32
    %c0_i32_9 = arith.constant 0 : i32
    %12 = arith.cmpi ne, %11, %c0_i32_9 : i32
    scf.if %12 {
      %c0_10 = arith.constant 0 : index
      %c0_11 = arith.constant 0 : index
      %13 = vector.load %arg7[%c0_10, %c0_11] : memref<16x128xf32, #tpu.memory_space<vmem>>, vector<16x128xf32>
      %c0_12 = arith.constant 0 : index
      %c0_13 = arith.constant 0 : index
      %14 = vector.load %arg5[%c0_12, %c0_13] : memref<1x128xf32, #tpu.memory_space<vmem>>, vector<1x128xf32>
      %15 = vector.broadcast %14 : vector<1x128xf32> to vector<16x128xf32>
      %16 = arith.addf %13, %15 : vector<16x128xf32>
      %c0_14 = arith.constant 0 : index
      %c0_15 = arith.constant 0 : index
      %17 = vector.load %arg6[%c0_14, %c0_15] : memref<16x128xf32, #tpu.memory_space<vmem>>, vector<16x128xf32>
      tpu.vector_store %arg6[%c0_14, %c0_15], %16 {strides = array<i32>} : memref<16x128xf32, #tpu.memory_space<vmem>>, vector<16x128xf32>,
    } else {
    }
    return
  }
  func.func @transform_0(%arg0: i32, %arg1: i32, %arg2: i32) -> (i32, i32) {
    %c0_i32 = arith.constant 0 : i32
    return %arg0, %arg2 : i32, i32
  }
  func.func @transform_1(%arg0: i32, %arg1: i32, %arg2: i32) -> (i32, i32) {
    %c0_i32 = arith.constant 0 : i32
    return %arg2, %arg1 : i32, i32
  }
  func.func @transform_2(%arg0: i32, %arg1: i32, %arg2: i32) -> (i32, i32) {
    %c0_i32 = arith.constant 0 : i32
    %c0_i32_0 = arith.constant 0 : i32
    return %c0_i32, %arg1 : i32, i32
  }
  func.func @transform_3(%arg0: i32, %arg1: i32, %arg2: i32) -> (i32, i32) {
    %c0_i32 = arith.constant 0 : i32
    return %arg0, %arg1 : i32, i32
  }
}

</mosaic_0001>

<llo_original>
// kernel: tpu_custom_call.1
$region0: #{tpu_custom_call.1}
  #allocation0 [shape = 'u32[]', space=smem, size = 0x4, offset = 0x4, fixed_abs, tag = 'smem constant byte address 0x4 - core index']
  #allocation1 [shape = 'u32[144,128]{1,0:T(1,128)}', space=vmem, size = 0x12000, scoped, tag = 'internal scratch']
  #allocation2 [shape = 'f32[16,128]{1,0:T(8,128)}', space=vmem, size = 0x2000, scoped, tag = 'scratch operand']
  %s0 = inlined_call_operand.hbm [shape: f32[16,128], index: 0, kind: input, shape index: {}]
  %s1 = inlined_call_operand.hbm [shape: bf16[128,384], index: 1, kind: input, shape index: {}]
  %s2 = inlined_call_operand.vmem [shape: f32[1,384], index: 2, kind: input, shape index: {}]
  %s3 = inlined_call_operand.hbm [shape: f32[16,384], index: 3, kind: output, shape index: {}]
  %s4 = sld [smem:[#allocation0]]
  $region61: #{tpu_custom_call.1} parent=0
    _
  %s6 = ssub.s32 1, %s4
  %s7 = scalar_select 0, %s6, %s4
  $region1: #{tpu_custom_call.1} parent=0
    #allocation3 [shape = 'u8[8192]{0}', space=vmem, size = 0x2000, scoped, tag = 'input window, operand 0, single buffered']
    #allocation4 [shape = 's32[2]{0}', space=sflag, size = 0x8, scoped, tag = 'scoped memory for tpu_custom_call.1']
    #allocation5 [shape = 's32[2]{0}', space=sflag, size = 0x8, scoped, tag = 'scoped memory for tpu_custom_call.1']
    #allocation6 [shape = 'u8[65536]{0}', space=vmem, size = 0x10000, scoped, tag = 'input window, operand 1']
    #allocation7 [shape = 's32[2]{0}', space=sflag, size = 0x8, scoped, tag = 'scoped memory for tpu_custom_call.1']
    #allocation8 [shape = 'u8[16384]{0}', space=vmem, size = 0x4000, scoped, tag = 'output window, operand 0']
    %8 = vsyncpa [#allocation4], 0
    %9 = vsyncpa [#allocation7], 0
    %s10 = scalar_lea.sflag [#allocation7], 1
    %11 = vsyncpa %s10, 0
    %12 = vsyncpa [#allocation5], 0
    %s13 = scalar_lea.sflag [#allocation5], 1
    %14 = vsyncpa %s13, 0
    loop: start=0, step=1, limit=5
    $region2: #{tpu_custom_call.1} parent=1 // loop_pre_header
      _
    $region3: #{tpu_custom_call.1} parent=1 // loop_header
      %s16 = sphi 0, %s20
      %p17 = scmp.ge.s32.totalorder %s16, 5
      %s23 = sphi 0, %s42
      %s24 = sphi 0, %s38
      %s25 = sphi 0, %s34
      %s26 = sphi 0, %s23
      %s27 = sphi 0, %s24
      %s28 = sphi 0, %s25
      %s29 = sphi 0, %s26
      %s30 = sphi 0, %s27
      %s31 = sphi 0, %s28
      %s47 = sphi 0, %s49
      %s50 = sphi 0, %s47
      %s51 = sphi 0, %s50
      %s67 = sphi 0, %s51
      %s75 = sphi 0, %s77
      %s78 = sphi 0, %s75
      %s79 = sphi 0, %s78
      %s95 = sphi 0, %s79
      %s101 = sphi 0, %s103
      %s104 = sphi 0, %s101
      %s105 = sphi 0, %s104
      %s121 = sphi 0, %s105
      %s129 = sphi 0, %s131
      %s132 = sphi 0, %s129
      %s133 = sphi 0, %s132
      %s149 = sphi 0, %s133
    $region4: #{tpu_custom_call.1} parent=1 // loop_header_branch
      %19 = sbr.rel (%p17) target = $region8
    $region5: #{tpu_custom_call.1} parent=1 // loop_body
      %s21 = ssub.s32 %s16, 1
      %s22 = ssub.s32 %s16, 2
      %s32 = sadd.s32 1, %s25
      %p33 = scmp.ge.s32.totalorder %s32, 1
      %s34 = scalar_select %p33, 0, %s32
      %s35 = sadd.s32 1, %s24
      %s36 = scalar_select %p33, %s35, %s24
      %p37 = scmp.ge.s32.totalorder %s36, 3
      %s38 = scalar_select %p37, 0, %s36
      %s39 = sadd.s32 1, %s23
      %s40 = scalar_select %p37, %s39, %s23
      %p41 = scmp.ge.s32.totalorder %s40, 1
      %s42 = scalar_select %p41, 0, %s40
      %s43 = ssub.s32 %s23, %s42
      %s44 = ssub.s32 %s25, %s34
      %s45 = sor.u32 %s43, %s44
      %p46 = scmp.eq.s32.totalorder %s45, 0
      %s48 = sadd.s32 %s47, 1
      %s49 = scalar_select %p46, %s47, %s48
      %p52 = pneg %p46
      %p53 = scmp.eq.s32.totalorder %s16, 2
      %p54 = por %p52, %p53
      %p55 = scmp.ne.s32.totalorder %s47, %s50
      %p56 = scmp.eq.s32.totalorder %s16, 0
      %p57 = por %p55, %p56
      %p58 = scmp.ne.s32.totalorder %s47, %s50
      %p59 = scmp.eq.s32.totalorder %s21, 2
      %p60 = por %p58, %p59
      %p61 = scmp.ne.s32.totalorder %s50, %s51
      %p62 = scmp.eq.s32.totalorder %s21, 0
      %p63 = por %p61, %p62
      %p64 = scmp.ne.s32.totalorder %s50, %s51
      %p65 = scmp.eq.s32.totalorder %s22, 2
      %p66 = por %p64, %p65
      %p68 = scmp.ne.s32.totalorder %s51, %s67
      %p69 = scmp.eq.s32.totalorder %s22, 0
      %p70 = por %p68, %p69
      %s71 = ssub.s32 %s25, %s34
      %s72 = ssub.s32 %s24, %s38
      %s73 = sor.u32 %s71, %s72
      %p74 = scmp.eq.s32.totalorder %s73, 0
      %s76 = sadd.s32 %s75, 1
      %s77 = scalar_select %p74, %s75, %s76
      %p80 = pneg %p74
      %p81 = scmp.eq.s32.totalorder %s16, 2
      %p82 = por %p80, %p81
      %p83 = scmp.ne.s32.totalorder %s75, %s78
      %p84 = scmp.eq.s32.totalorder %s16, 0
      %p85 = por %p83, %p84
      %p86 = scmp.ne.s32.totalorder %s75, %s78
      %p87 = scmp.eq.s32.totalorder %s21, 2
      %p88 = por %p86, %p87
      %p89 = scmp.ne.s32.totalorder %s78, %s79
      %p90 = scmp.eq.s32.totalorder %s21, 0
      %p91 = por %p89, %p90
      %p92 = scmp.ne.s32.totalorder %s78, %s79
      %p93 = scmp.eq.s32.totalorder %s22, 2
      %p94 = por %p92, %p93
      %p96 = scmp.ne.s32.totalorder %s79, %s95
      %p97 = scmp.eq.s32.totalorder %s22, 0
      %p98 = por %p96, %p97
      %s99 = ssub.s32 %s24, %s38
      %p100 = scmp.eq.s32.totalorder %s99, 0
      %s102 = sadd.s32 %s101, 1
      %s103 = scalar_select %p100, %s101, %s102
      %p106 = pneg %p100
      %p107 = scmp.eq.s32.totalorder %s16, 2
      %p108 = por %p106, %p107
      %p109 = scmp.ne.s32.totalorder %s101, %s104
      %p110 = scmp.eq.s32.totalorder %s16, 0
      %p111 = por %p109, %p110
      %p112 = scmp.ne.s32.totalorder %s101, %s104
      %p113 = scmp.eq.s32.totalorder %s21, 2
      %p114 = por %p112, %p113
      %p115 = scmp.ne.s32.totalorder %s104, %s105
      %p116 = scmp.eq.s32.totalorder %s21, 0
      %p117 = por %p115, %p116
      %p118 = scmp.ne.s32.totalorder %s104, %s105
      %p119 = scmp.eq.s32.totalorder %s22, 2
      %p120 = por %p118, %p119
      %p122 = scmp.ne.s32.totalorder %s105, %s121
      %p123 = scmp.eq.s32.totalorder %s22, 0
      %p124 = por %p122, %p123
      %s125 = ssub.s32 %s23, %s42
      %s126 = ssub.s32 %s24, %s38
      %s127 = sor.u32 %s125, %s126
      %p128 = scmp.eq.s32.totalorder %s127, 0
      %s130 = sadd.s32 %s129, 1
      %s131 = scalar_select %p128, %s129, %s130
      %p134 = pneg %p128
      %p135 = scmp.eq.s32.totalorder %s16, 2
      %p136 = por %p134, %p135
      %p137 = scmp.ne.s32.totalorder %s129, %s132
      %p138 = scmp.eq.s32.totalorder %s16, 0
      %p139 = por %p137, %p138
      %p140 = scmp.ne.s32.totalorder %s129, %s132
      %p141 = scmp.eq.s32.totalorder %s21, 2
      %p142 = por %p140, %p141
      %p143 = scmp.ne.s32.totalorder %s132, %s133
      %p144 = scmp.eq.s32.totalorder %s21, 0
      %p145 = por %p143, %p144
      %p146 = scmp.ne.s32.totalorder %s132, %s133
      %p147 = scmp.eq.s32.totalorder %s22, 2
      %p148 = por %p146, %p147
      %p150 = scmp.ne.s32.totalorder %s133, %s149
      %p151 = scmp.eq.s32.totalorder %s22, 0
      %p152 = por %p150, %p151
      %p153 = scmp.le.s32.totalorder 1, %s16
      %p154 = scmp.lt.s32.totalorder %s16, 4
      %p155 = pnand %p153, %p154
      %p156 = pneg %p155
      // Predicated region
      $region9: #{tpu_custom_call.1} parent=5 // pred_check
        _
      $region10: #{tpu_custom_call.1} parent=5 // pred_check_branch
        %158 = sbr.rel (%p155) target = $region12
      $region11: #{tpu_custom_call.1} parent=5 // pred_region
        %s159 = ssub.s32 %s16, 1
        // Predicated region
        $region13: #{tpu_custom_call.1} parent=11 // pred_check
          %p160 = pneg %p63
        $region14: #{tpu_custom_call.1} parent=11 // pred_check_branch
          %162 = sbr.rel (%p160) target = $region16
        $region15: #{tpu_custom_call.1} parent=11 // pred_region
          %s163 = smul.u32 2, %s26
          %s165 = ssub.s32 256, 256
          %166 = vsyncadd [#allocation4], %s165
          %s167 = sadd.s32 %s28, %s163
          %s168 = smul.addr %s167, 128
          %s169 = scalar_lea.hbm %s0, %s168
          %s170 = sshll.u32 [#allocation3], 4
          %s171 = int_to_ptr.vmem [resolvable:$true] %s170
          %176 = dma.hbm_to_vmem [thread:$0]  %s169, 256, %s171, [#allocation4], 128, 128, 8
        $region16: #{tpu_custom_call.1} parent=11 // pred_fallthru
          _
      $region12: #{tpu_custom_call.1} parent=5 // pred_fallthru
        _
      %p177 = scmp.lt.s32.totalorder %s16, 3
      // Predicated region
      $region17: #{tpu_custom_call.1} parent=5 // pred_check
        %p178 = pneg %p177
      $region18: #{tpu_custom_call.1} parent=5 // pred_check_branch
        %180 = sbr.rel (%p178) target = $region20
      $region19: #{tpu_custom_call.1} parent=5 // pred_region
        // Predicated region
        $region21: #{tpu_custom_call.1} parent=19 // pred_check
          %p181 = pneg %p85
        $region22: #{tpu_custom_call.1} parent=19 // pred_check_branch
          %183 = sbr.rel (%p181) target = $region24
        $region23: #{tpu_custom_call.1} parent=19 // pred_region
          %s184 = sand.u32 %s75, 1
          %s185 = scalar_lea.sflag [#allocation7], %s184
          %s186 = sand.u32 %s75, 1
          %s187 = smul.addr %s186, 64
          %s188 = scalar_lea.vmem [#allocation6], %s187
          %s189 = smul.u32 16, %s25
          %s191 = ssub.s32 1024, 1024
          %192 = vsyncadd %s185, %s191
          %s193 = smul.addr %s189, 3
          %s194 = sadd.s32 %s24, %s193
          %s195 = smul.addr %s194, 64
          %s196 = scalar_lea.hbm %s1, %s195
          %s197 = sshll.u32 %s188, 4
          %s198 = int_to_ptr.vmem [resolvable:$true] %s197
          %203 = dma.hbm_to_vmem [thread:$0]  %s196, 1024, %s198, %s185, 192, 64, 4
        $region24: #{tpu_custom_call.1} parent=19 // pred_fallthru
          _
        // Predicated region
        $region25: #{tpu_custom_call.1} parent=19 // pred_check
          %p204 = pneg %p111
        $region26: #{tpu_custom_call.1} parent=19 // pred_check_branch
          %206 = sbr.rel (%p204) target = $region28
        $region27: #{tpu_custom_call.1} parent=19 // pred_region
          %p207 = scmp.lt.s32.totalorder %s24, 2
          %s208 = scalar_select %p207, %s24, 2
          %s209 = scalar_lea.vmem %s2, %s208
        $region28: #{tpu_custom_call.1} parent=19 // pred_fallthru
          _
      $region20: #{tpu_custom_call.1} parent=5 // pred_fallthru
        _
      %p210 = scmp.le.s32.totalorder 1, %s16
      %p211 = scmp.lt.s32.totalorder %s16, 4
      %p212 = pnand %p210, %p211
      %p213 = pneg %p212
      // Predicated region
      $region29: #{tpu_custom_call.1} parent=5 // pred_check
        _
      $region30: #{tpu_custom_call.1} parent=5 // pred_check_branch
        %215 = sbr.rel (%p212) target = $region32
      $region31: #{tpu_custom_call.1} parent=5 // pred_region
        %s216 = ssub.s32 %s16, 1
        // Predicated region
        $region33: #{tpu_custom_call.1} parent=31 // pred_check
          %p217 = pneg %p63
        $region34: #{tpu_custom_call.1} parent=31 // pred_check_branch
          %219 = sbr.rel (%p217) target = $region36
        $region35: #{tpu_custom_call.1} parent=31 // pred_region
          %220 = dma.done [#allocation4], 256
        $region36: #{tpu_custom_call.1} parent=31 // pred_fallthru
          _
        %s221 = sand.u32 %s78, 1
        %s222 = scalar_lea.sflag [#allocation7], %s221
        %s223 = sand.u32 %s78, 1
        %s224 = smul.addr %s223, 64
        %s225 = scalar_lea.vmem [#allocation6], %s224
        // Predicated region
        $region37: #{tpu_custom_call.1} parent=31 // pred_check
          %p226 = pneg %p91
        $region38: #{tpu_custom_call.1} parent=31 // pred_check_branch
          %228 = sbr.rel (%p226) target = $region40
        $region39: #{tpu_custom_call.1} parent=31 // pred_region
          %229 = dma.done %s222, 1024
        $region40: #{tpu_custom_call.1} parent=31 // pred_fallthru
          _
        %p230 = pneg %p63
        %p231 = pneg %p60
        %s232 = sand.u32 %s78, 1
        %s233 = scalar_lea.sflag [#allocation7], %s232
        %s234 = sand.u32 %s78, 1
        %s235 = smul.addr %s234, 64
        %s236 = scalar_lea.vmem [#allocation6], %s235
        %p237 = pneg %p91
        %p238 = pneg %p88
        %p239 = scmp.lt.s32.totalorder %s27, 2
        %s240 = scalar_select %p239, %s27, 2
        %s241 = scalar_lea.vmem %s2, %s240
        %p242 = pneg %p117
        %p243 = pneg %p114
        %p244 = pneg %p145
        %p245 = pneg %p142
        %s246 = sand.u32 %s132, 1
        %s247 = scalar_lea.sflag [#allocation5], %s246
        %s248 = sand.u32 %s132, 1
        %s249 = smul.addr %s248, 16
        %s250 = scalar_lea.vmem [#allocation8], %s249
        %s251 = smul.u32 2, %s26
        %s252 = smul.u32 16, %s28
        %p253 = scmp.lt.s32.totalorder %s27, 2
        %s254 = scalar_select %p253, %s27, 2
        %s255 = scalar_lea.vmem %s2, %s254
        %s256 = smul.u32 2, %s26
        %p258 = scmp.eq.s32.totalorder %s28, 0
        // Predicated region
        $region41: #{tpu_custom_call.1} parent=31 // pred_check
          %p259 = pneg %p258
        $region42: #{tpu_custom_call.1} parent=31 // pred_check_branch
          %261 = sbr.rel (%p259) target = $region44
        $region43: #{tpu_custom_call.1} parent=31 // pred_region
          %262 = vst [vmem:[#allocation2] sm:$0xff] 0.0
          %263 = vst [vmem:[#allocation2 + $0x8] sm:$0xff] 0.0
        $region44: #{tpu_custom_call.1} parent=31 // pred_fallthru
          _
        %v264 = vld [vmem:[#allocation2] sm:$0xff]
        %v265 = vld [vmem:[#allocation2 + $0x8] sm:$0xff]
        %v266 = vld [vmem:[#allocation3] sm:$0xff]
        %v267 = vld [vmem:[#allocation3 + $0x8] sm:$0xff]
        %v268 = vpack.c.bf16 %v267, %v266
        %v269 = vld [vmem:[%s225] sm:$0xf]
        %v270 = vld [vmem:[%s225 + $0x4] sm:$0xf]
        %v271 = vld [vmem:[%s225 + $0x8] sm:$0xf]
        %v272 = vld [vmem:[%s225 + $0xc] sm:$0xf]
        %v273 = vld [vmem:[%s225 + $0x10] sm:$0xf]
        %v274 = vld [vmem:[%s225 + $0x14] sm:$0xf]
        %v275 = vld [vmem:[%s225 + $0x18] sm:$0xf]
        %v276 = vld [vmem:[%s225 + $0x1c] sm:$0xf]
        %v277 = vld [vmem:[%s225 + $0x20] sm:$0xf]
        %v278 = vld [vmem:[%s225 + $0x24] sm:$0xf]
        %v279 = vld [vmem:[%s225 + $0x28] sm:$0xf]
        %v280 = vld [vmem:[%s225 + $0x2c] sm:$0xf]
        %v281 = vld [vmem:[%s225 + $0x30] sm:$0xf]
        %v282 = vld [vmem:[%s225 + $0x34] sm:$0xf]
        %v283 = vld [vmem:[%s225 + $0x38] sm:$0xf]
        %v284 = vld [vmem:[%s225 + $0x3c] sm:$0xf]
        %v301 = vunpack.c.l.b16 %v269
        %v302 = vunpack.c.l.b16 %v270
        %v303 = vunpack.c.l.b16 %v271
        %v304 = vunpack.c.l.b16 %v272
        %v305 = vunpack.c.l.b16 %v273
        %v306 = vunpack.c.l.b16 %v274
        %v307 = vunpack.c.l.b16 %v275
        %v308 = vunpack.c.l.b16 %v276
        %v309 = vunpack.c.l.b16 %v277
        %v310 = vunpack.c.l.b16 %v278
        %v311 = vunpack.c.l.b16 %v279
        %v312 = vunpack.c.l.b16 %v280
        %v313 = vunpack.c.l.b16 %v281
        %v314 = vunpack.c.l.b16 %v282
        %v315 = vunpack.c.l.b16 %v283
        %v316 = vunpack.c.l.b16 %v284
        %v317 = vpack.c.b16 %v302, %v301
        %v318 = vpack.c.b16 %v304, %v303
        %v319 = vpack.c.b16 %v306, %v305
        %v320 = vpack.c.b16 %v308, %v307
        %v321 = vpack.c.b16 %v310, %v309
        %v322 = vpack.c.b16 %v312, %v311
        %v323 = vpack.c.b16 %v314, %v313
        %v324 = vpack.c.b16 %v316, %v315
        %333 = vmatprep.subr.bf16.mxu0 0
        %334 = vmatpush1.bf16.msra.mxu0 %v317
        %335 = vmatprep.subr.bf16.mxu0 0
        %336 = vmatpush1.bf16.msra.mxu0 %v318
        %337 = vmatprep.subr.bf16.mxu0 0
        %338 = vmatpush1.bf16.msra.mxu0 %v319
        %339 = vmatprep.subr.bf16.mxu0 0
        %340 = vmatpush1.bf16.msra.mxu0 %v320
        %341 = vmatprep.subr.bf16.mxu0 0
        %342 = vmatpush1.bf16.msra.mxu0 %v321
        %343 = vmatprep.subr.bf16.mxu0 0
        %344 = vmatpush1.bf16.msra.mxu0 %v322
        %345 = vmatprep.subr.bf16.mxu0 0
        %346 = vmatpush1.bf16.msra.mxu0 %v323
        %347 = vmatprep.subr.bf16.mxu0 0
        %348 = vmatpush1.bf16.msra.mxu0 %v324
        %349 = vmatprep.subr.bf16.mxu0 0
        %350 = vmatpush1.bf16.msra.mxu0 0
        %351 = vmatprep.subr.bf16.mxu0 0
        %352 = vmatpush1.bf16.msra.mxu0 0
        %353 = vmatprep.subr.bf16.mxu0 0
        %354 = vmatpush1.bf16.msra.mxu0 0
        %355 = vmatprep.subr.bf16.mxu0 0
        %356 = vmatpush1.bf16.msra.mxu0 0
        %357 = vmatprep.subr.bf16.mxu0 0
        %358 = vmatpush1.bf16.msra.mxu0 0
        %359 = vmatprep.subr.bf16.mxu0 0
        %360 = vmatpush1.bf16.msra.mxu0 0
        %361 = vmatprep.subr.bf16.mxu0 0
        %362 = vmatpush1.bf16.msra.mxu0 0
        %363 = vmatprep.subr.bf16.mxu0 0
        %364 = vmatpush1.bf16.msra.mxu0 0
        %365 = vmatprep.mubr.bf16.mxu0 0
        %366 = vmatmul.mubr.bf16.gmra.mrb[0].mxu0 %v268
        %v367 = vpop.f32.mrb[0].mxu0
        %v368 = vadd.f32 0.0, %v367
        %v369 = vpop.f32.mrb[0].mxu0
        %v370 = vpop.f32.mrb[0].mxu0
        %v371 = vadd.f32 0.0, %v370
        %v372 = vpop.f32.mrb[0].mxu0
        %373 = vdwg.mxu0
        %v374 = vadd.f32 %v264, %v368
        %v375 = vadd.f32 %v265, %v371
        %376 = vst [vmem:[#allocation2] sm:$0xff] %v374
        %377 = vst [vmem:[#allocation2 + $0x8] sm:$0xff] %v375
        // Predicated region
        $region45: #{tpu_custom_call.1} parent=31 // pred_check
          %p378 = pneg %p258
        $region46: #{tpu_custom_call.1} parent=31 // pred_check_branch
          %380 = sbr.rel (%p378) target = $region48
        $region47: #{tpu_custom_call.1} parent=31 // pred_region
          %v381 = vld [vmem:[#allocation2] sm:$0xff]
          %v382 = vld [vmem:[#allocation2 + $0x8] sm:$0xff]
          %v383 = vld [vmem:[%s255] sm:$0x1]
          %v385 = vlaneseq
          %v386 = vshrl.u32 %v385, 7
          %v387 = vsub.s32 0, %v386
          %v388 = vrot.slane %v383, %v387
          %v390 = vadd.f32 %v381, %v388
          %v391 = vadd.f32 %v382, %v388
          %392 = vst [vmem:[%s250] sm:$0xff] %v390
          %393 = vst [vmem:[%s250 + $0x8] sm:$0xff] %v391
        $region48: #{tpu_custom_call.1} parent=31 // pred_fallthru
          _
        %s394 = sand.u32 %s132, 1
        %s395 = scalar_lea.sflag [#allocation5], %s394
        %s396 = sand.u32 %s132, 1
        %s397 = smul.addr %s396, 16
        %s398 = scalar_lea.vmem [#allocation8], %s397
        // Predicated region
        $region49: #{tpu_custom_call.1} parent=31 // pred_check
          %p399 = pneg %p142
        $region50: #{tpu_custom_call.1} parent=31 // pred_check_branch
          %401 = sbr.rel (%p399) target = $region52
        $region51: #{tpu_custom_call.1} parent=31 // pred_region
          %s402 = smul.u32 2, %s26
          %s404 = ssub.s32 256, 256
          %405 = vsyncadd %s395, %s404
          %s406 = smul.addr %s402, 3
          %s407 = sadd.s32 %s27, %s406
          %s408 = smul.addr %s407, 128
          %s409 = scalar_lea.hbm %s3, %s408
          %s410 = sshll.u32 %s398, 4
          %s411 = int_to_ptr.vmem [resolvable:$true] %s410
          %416 = dma.vmem_to_hbm [thread:$0]  %s411, 256, %s409, %s395, 128, 384, 8
        $region52: #{tpu_custom_call.1} parent=31 // pred_fallthru
          _
      $region32: #{tpu_custom_call.1} parent=5 // pred_fallthru
        _
      %p417 = scmp.le.s32.totalorder 2, %s16
      // Predicated region
      $region53: #{tpu_custom_call.1} parent=5 // pred_check
        %p418 = pneg %p417
      $region54: #{tpu_custom_call.1} parent=5 // pred_check_branch
        %420 = sbr.rel (%p418) target = $region56
      $region55: #{tpu_custom_call.1} parent=5 // pred_region
        %s421 = ssub.s32 %s16, 2
        // Predicated region
        $region57: #{tpu_custom_call.1} parent=55 // pred_check
          %p422 = pneg %p148
        $region58: #{tpu_custom_call.1} parent=55 // pred_check_branch
          %424 = sbr.rel (%p422) target = $region60
        $region59: #{tpu_custom_call.1} parent=55 // pred_region
          %s425 = sand.u32 %s133, 1
          %s426 = scalar_lea.sflag [#allocation5], %s425
          %s427 = sand.u32 %s133, 1
          %s428 = smul.addr %s427, 16
          %s429 = scalar_lea.vmem [#allocation8], %s428
          %430 = dma.done %s426, 256
        $region60: #{tpu_custom_call.1} parent=55 // pred_fallthru
          _
      $region56: #{tpu_custom_call.1} parent=5 // pred_fallthru
        _
    $region6: #{tpu_custom_call.1} parent=1 // loop_footer
      %s20 = sadd.s32 1, %s16
    $region7: #{tpu_custom_call.1} parent=1 // loop_footer_branch
      %15 = sbr.rel target = $region3
    $region8: #{tpu_custom_call.1} parent=1 // loop_exit
      _
    %431 = vsyncpa [#allocation4], 1
    %s432 = scalar_lea.sflag [#allocation4], 1
    %433 = vsyncpa %s432, 1
    %434 = vsyncpa [#allocation7], 1
    %s435 = scalar_lea.sflag [#allocation7], 1
    %436 = vsyncpa %s435, 1
    %437 = vsyncpa [#allocation5], 1
    %s438 = scalar_lea.sflag [#allocation5], 1
    %439 = vsyncpa %s438, 1

</llo_original>
